<compile_context>
chip_gen: v6e
topology: v6e:2x2x1
jax: 0.10.0
libtpu: 0.0.40
codegen_flags: <defaults>
</compile_context>

<pallas_src>
import jax
import jax.numpy as jnp
from jax.experimental import pallas as pl
from jax.experimental.pallas import tpu as pltpu


def _round_up(a, b):
    return (a + b - 1) // b * b


# ----------------------------- kernels -----------------------------

def _xw_kernel(x_ref, w_ref, o_ref):
    # Feature transform X @ W on the MXU; f32 accumulation, bf16 output.
    o_ref[...] = jnp.dot(
        x_ref[...], w_ref[...], preferred_element_type=jnp.float32
    ).astype(o_ref.dtype)


def _agg_kernel(adj_ref, xw_ref, b_ref, mask_ref, out_ref, acc_ref):
    # acc += A_hat_tile @ XW_tile over the k (reduction) grid axis.
    k = pl.program_id(2)

    @pl.when(k == 0)
    def _():
        acc_ref[...] = jnp.zeros_like(acc_ref)

    acc_ref[...] += jnp.dot(
        adj_ref[...], xw_ref[...], preferred_element_type=jnp.float32
    )

    @pl.when(k == pl.num_programs(2) - 1)
    def _():
        # bias + ReLU + pre-scaled dropout mask, only after the full reduction.
        h = jnp.maximum(acc_ref[...] + b_ref[...], 0.0)
        out_ref[...] = (h * mask_ref[...]).astype(out_ref.dtype)


# ------------------------------ glue -------------------------------

def _gcn_norm_adj(edge_index, num_nodes):
    """Dense D^{-1/2} (A + I) D^{-1/2} from edge_index [2, E] (plain JAX glue)."""
    src = edge_index[0]
    dst = edge_index[1]
    loop = jnp.arange(num_nodes, dtype=edge_index.dtype)
    src = jnp.concatenate([src, loop])
    dst = jnp.concatenate([dst, loop])
    ones = jnp.ones(src.shape[0], dtype=jnp.float32)
    deg = jnp.zeros((num_nodes,), jnp.float32).at[dst].add(ones)
    dinv = jnp.where(deg > 0, 1.0 / jnp.sqrt(deg), 0.0)
    w = dinv[dst] * dinv[src]
    # out[dst] += w * x[src]  <=>  adj[dst, src] += w ; out = adj @ x
    adj = jnp.zeros((num_nodes, num_nodes), jnp.float32).at[dst, src].add(w)
    return adj


def crd_forward(x, edge_index, weight, bias, *, p, training, key=None):
    n, d_in = x.shape
    d_out = weight.shape[1]

    # Tiling / padding: lane-dense, (8,128)-aligned, fits v5e's 16 MiB scoped VMEM.
    tn = min(512, _round_up(d_out, 128))
    d_out_p = _round_up(d_out, tn)
    tm = tk = min(512, _round_up(n, 128))
    n_p = _round_up(n, tm)

    # Padded, bf16 operands for the memory-bound aggregation matmul.
    adj = _gcn_norm_adj(edge_index, n)
    adj_p = jnp.zeros((n_p, n_p), jnp.bfloat16).at[:n, :n].set(adj.astype(jnp.bfloat16))
    x_p = jnp.zeros((n_p, d_in), jnp.bfloat16).at[:n, :].set(x.astype(jnp.bfloat16))
    w_p = jnp.zeros((d_in, d_out_p), jnp.bfloat16).at[:, :d_out].set(
        weight.astype(jnp.bfloat16))
    b_p = jnp.zeros((1, d_out_p), jnp.float32).at[:, :d_out].set(
        jnp.asarray(bias, jnp.float32).reshape(1, d_out))

    # Pre-scaled inverted-dropout mask (0 or 1/(1-p)); identity when not training.
    if training and p > 0.0:
        if key is None:
            key = jax.random.PRNGKey(0)
        keep = jax.random.bernoulli(key, 1.0 - p, (n_p, d_out_p))
        mask = keep.astype(jnp.float32) * (1.0 / (1.0 - p))
    else:
        mask = jnp.ones((n_p, d_out_p), jnp.float32)

    # Step 1: XW = X @ W (cheap; its own small tiled kernel).
    xw = pl.pallas_call(
        _xw_kernel,
        out_shape=jax.ShapeDtypeStruct((n_p, d_out_p), jnp.bfloat16),
        grid=(n_p // tm,),
        in_specs=[
            pl.BlockSpec((tm, d_in), lambda i: (i, 0)),
            pl.BlockSpec((d_in, d_out_p), lambda i: (0, 0)),
        ],
        out_specs=pl.BlockSpec((tm, d_out_p), lambda i: (i, 0)),
        compiler_params=pltpu.CompilerParams(dimension_semantics=("parallel",)),
    )(x_p, w_p)

    # Step 2: out = dropout(relu(A_hat @ XW + b)), tiled + double-buffered.
    grid = (n_p // tm, d_out_p // tn, n_p // tk)
    cost = pl.CostEstimate(
        flops=2 * n_p * n_p * d_out_p,
        transcendentals=0,
        bytes_accessed=(adj_p.size * 2 + xw.size * 2 + mask.size * 4
                        + b_p.size * 4 + n_p * d_out_p * 4),
    )
    out_p = pl.pallas_call(
        _agg_kernel,
        out_shape=jax.ShapeDtypeStruct((n_p, d_out_p), jnp.float32),
        grid=grid,
        in_specs=[
            pl.BlockSpec((tm, tk), lambda i, j, k: (i, k)),   # adj tile (bf16)
            pl.BlockSpec((tk, tn), lambda i, j, k: (k, j)),   # xw tile  (bf16)
            pl.BlockSpec((1, tn), lambda i, j, k: (0, j)),    # bias
            pl.BlockSpec((tm, tn), lambda i, j, k: (i, j)),   # dropout mask
        ],
        out_specs=pl.BlockSpec((tm, tn), lambda i, j, k: (i, j)),
        scratch_shapes=[pltpu.VMEM((tm, tn), jnp.float32)],
        compiler_params=pltpu.CompilerParams(
            dimension_semantics=("parallel", "parallel", "arbitrary")),
        cost_estimate=cost,
    )(adj_p, xw, b_p, mask)

    return out_p[:n, :d_out]


def init_crd_params(key, d_in, d_out):
    """GCNConv default init: glorot weight, zero bias (deterministic from key)."""
    bound = (6.0 / (d_in + d_out)) ** 0.5
    weight = jax.random.uniform(key, (d_in, d_out), jnp.float32, -bound, bound)
    bias = jnp.zeros((1, d_out), jnp.float32)
    return weight, bias


if __name__ == "__main__":
    key = jax.random.PRNGKey(0)
    k_w, k_x, k_drop = jax.random.split(key, 3)

    N, D_IN, D_OUT, P = 16, 8, 32, 0.5

    # Node features.
    x = jax.random.normal(k_x, (N, D_IN), jnp.float32)

    # Deterministic ring graph (undirected): i <-> (i+1) mod N.
    idx = jnp.arange(N, dtype=jnp.int32)
    src = jnp.concatenate([idx, (idx + 1) % N])
    dst = jnp.concatenate([(idx + 1) % N, idx])
    edge_index = jnp.stack([src, dst], axis=0)  # [2, E], E = 2N

    weight, bias = init_crd_params(k_w, D_IN, D_OUT)

    # Freshly-constructed torch modules default to training mode -> dropout active.
    out = crd_forward(x, edge_index, weight, bias, p=P, training=True, key=k_drop)
    jax.block_until_ready(out)

    assert out.shape == (N, D_OUT) and out.dtype == jnp.float32
    print("KERNEL_OK")
</pallas_src>

<mosaic_0001>
module attributes {stable_mosaic.version = 11 : i64} {
  func.func @_xw_kernel(%arg0: i32, %arg1: memref<128x8xbf16, #tpu.memory_space<vmem>>, %arg2: memref<8x128xbf16, #tpu.memory_space<vmem>>, %arg3: memref<128x128xbf16, #tpu.memory_space<vmem>>) attributes {dimension_semantics = [#tpu.dimension_semantics<parallel>], iteration_bounds = array<i64: 1>, scalar_prefetch = 0 : i64, scratch_operands = 0 : i64, tpu.core_type = #tpu.core_type<tc>, window_params = [{transform_indices = @transform_0, window_bounds = array<i64: 128, 8>}, {pipeline_mode = #tpu.pipeline_mode<synchronous>, transform_indices = @transform_1, window_bounds = array<i64: 8, 128>}, {transform_indices = @transform_2, window_bounds = array<i64: 128, 128>}]} {
    %c0 = arith.constant 0 : index
    %c0_0 = arith.constant 0 : index
    %0 = vector.load %arg1[%c0, %c0_0] : memref<128x8xbf16, #tpu.memory_space<vmem>>, vector<128x8xbf16>
    %c0_1 = arith.constant 0 : index
    %c0_2 = arith.constant 0 : index
    %1 = vector.load %arg2[%c0_1, %c0_2] : memref<8x128xbf16, #tpu.memory_space<vmem>>, vector<8x128xbf16>
    %cst = arith.constant dense<0.000000e+00> : vector<128x128xf32>
    %2 = tpu.matmul %0, %1, %cst {dimension_numbers = #tpu.dot_dimension_numbers<[1], [0], [0], [1], [0, 0, 1, 1], [], []>} : vector<128x8xbf16>, vector<8x128xbf16>, vector<128x128xf32> -> vector<128x128xf32>
    %3 = arith.truncf %2 : vector<128x128xf32> to vector<128x128xbf16>
    %c0_3 = arith.constant 0 : index
    %c0_4 = arith.constant 0 : index
    %4 = vector.load %arg3[%c0_3, %c0_4] : memref<128x128xbf16, #tpu.memory_space<vmem>>, vector<128x128xbf16>
    tpu.vector_store %arg3[%c0_3, %c0_4], %3 {strides = array<i32>} : memref<128x128xbf16, #tpu.memory_space<vmem>>, vector<128x128xbf16>,
    return
  }
  func.func @transform_0(%arg0: i32) -> (i32, i32) {
    %c0_i32 = arith.constant 0 : i32
    %c0_i32_0 = arith.constant 0 : i32
    return %arg0, %c0_i32 : i32, i32
  }
  func.func @transform_1(%arg0: i32) -> (i32, i32) {
    %c0_i32 = arith.constant 0 : i32
    %c0_i32_0 = arith.constant 0 : i32
    %c0_i32_1 = arith.constant 0 : i32
    return %c0_i32, %c0_i32_0 : i32, i32
  }
  func.func @transform_2(%arg0: i32) -> (i32, i32) {
    %c0_i32 = arith.constant 0 : i32
    %c0_i32_0 = arith.constant 0 : i32
    return %arg0, %c0_i32 : i32, i32
  }
}

</mosaic_0001>

<llo_original>
// kernel: tpu_custom_call.1
$region0: #{tpu_custom_call.1}
  #allocation0 [shape = 'u32[]', space=smem, size = 0x4, offset = 0x4, fixed_abs, tag = 'smem constant byte address 0x4 - core index']
  #allocation1 [shape = 'u32[144,128]{1,0:T(1,128)}', space=vmem, size = 0x12000, scoped, tag = 'internal scratch']
  %s0 = inlined_call_operand.vmem [shape: bf16[128,8], index: 0, kind: input, shape index: {}]
  %s1 = inlined_call_operand.vmem [shape: bf16[8,128], index: 1, kind: input, shape index: {}]
  %s2 = inlined_call_operand.hbm [shape: bf16[128,128], index: 2, kind: output, shape index: {}]
  %s3 = sld [smem:[#allocation0]]
  $region18: #{tpu_custom_call.1} parent=0
    _
  %s5 = ssub.s32 1, %s3
  %s6 = scalar_select 0, %s5, %s3
  $region1: #{tpu_custom_call.1} parent=0
    #allocation2 [shape = 'u8[32768]{0}', space=vmem, size = 0x8000, scoped, tag = 'output window, operand 0, single buffered']
    #allocation3 [shape = 's32[1]{0}', space=sflag, size = 0x4, scoped, tag = 'scoped memory for tpu_custom_call.1']
    %7 = vsyncpa [#allocation3], 0
    // Predicated region
    $region2: #{tpu_custom_call.1} parent=1 // pred_check
      _
    $region3: #{tpu_custom_call.1} parent=1 // pred_check_branch
      %9 = sbr.rel (0) target = $region5
    $region4: #{tpu_custom_call.1} parent=1 // pred_region
      _
    $region5: #{tpu_custom_call.1} parent=1 // pred_fallthru
      _
    // Predicated region
    $region6: #{tpu_custom_call.1} parent=1 // pred_check
      _
    $region7: #{tpu_custom_call.1} parent=1 // pred_check_branch
      %11 = sbr.rel (0) target = $region9
    $region8: #{tpu_custom_call.1} parent=1 // pred_region
      _
    $region9: #{tpu_custom_call.1} parent=1 // pred_fallthru
      _
    %v13 = vld [vmem:[%s0] sm:$0xf]
    %v14 = vld [vmem:[%s0 + $0x4] sm:$0xf]
    %v15 = vld [vmem:[%s0 + $0x8] sm:$0xf]
    %v16 = vld [vmem:[%s0 + $0xc] sm:$0xf]
    %v17 = vld [vmem:[%s0 + $0x10] sm:$0xf]
    %v18 = vld [vmem:[%s0 + $0x14] sm:$0xf]
    %v19 = vld [vmem:[%s0 + $0x18] sm:$0xf]
    %v20 = vld [vmem:[%s0 + $0x1c] sm:$0xf]
    %v21 = vld [vmem:[%s0 + $0x20] sm:$0xf]
    %v22 = vld [vmem:[%s0 + $0x24] sm:$0xf]
    %v23 = vld [vmem:[%s0 + $0x28] sm:$0xf]
    %v24 = vld [vmem:[%s0 + $0x2c] sm:$0xf]
    %v25 = vld [vmem:[%s0 + $0x30] sm:$0xf]
    %v26 = vld [vmem:[%s0 + $0x34] sm:$0xf]
    %v27 = vld [vmem:[%s0 + $0x38] sm:$0xf]
    %v28 = vld [vmem:[%s0 + $0x3c] sm:$0xf]
    %v29 = vld [vmem:[%s1] sm:$0xf]
    %v46 = vunpack.c.l.b16 %v13
    %v47 = vunpack.c.l.b16 %v14
    %v48 = vunpack.c.l.b16 %v15
    %v49 = vunpack.c.l.b16 %v16
    %v50 = vunpack.c.l.b16 %v17
    %v51 = vunpack.c.l.b16 %v18
    %v52 = vunpack.c.l.b16 %v19
    %v53 = vunpack.c.l.b16 %v20
    %v54 = vunpack.c.l.b16 %v21
    %v55 = vunpack.c.l.b16 %v22
    %v56 = vunpack.c.l.b16 %v23
    %v57 = vunpack.c.l.b16 %v24
    %v58 = vunpack.c.l.b16 %v25
    %v59 = vunpack.c.l.b16 %v26
    %v60 = vunpack.c.l.b16 %v27
    %v61 = vunpack.c.l.b16 %v28
    %v62 = vpack.c.b16 %v47, %v46
    %v63 = vpack.c.b16 %v49, %v48
    %v64 = vpack.c.b16 %v51, %v50
    %v65 = vpack.c.b16 %v53, %v52
    %v66 = vpack.c.b16 %v55, %v54
    %v67 = vpack.c.b16 %v57, %v56
    %v68 = vpack.c.b16 %v59, %v58
    %v69 = vpack.c.b16 %v61, %v60
    %vm70 = vcmask 64512
    %v72 = vsel %vm70, %v62, 0
    %v75 = vsel %vm70, %v63, 0
    %v78 = vsel %vm70, %v64, 0
    %v81 = vsel %vm70, %v65, 0
    %v84 = vsel %vm70, %v66, 0
    %v87 = vsel %vm70, %v67, 0
    %v90 = vsel %vm70, %v68, 0
    %v93 = vsel %vm70, %v69, 0
    %vm95 = vcmask 1043456
    %v97 = vsel %vm95, %v29, 0
    %99 = vmatprep.subr.bf16.mxu0 0
    %100 = vmatpush1.bf16.msra.mxu0 0
    %101 = vmatprep.subr.bf16.mxu0 0
    %102 = vmatpush1.bf16.msra.mxu0 0
    %103 = vmatprep.subr.bf16.mxu0 0
    %104 = vmatpush1.bf16.msra.mxu0 0
    %105 = vmatprep.subr.bf16.mxu0 0
    %106 = vmatpush1.bf16.msra.mxu0 0
    %107 = vmatprep.subr.bf16.mxu0 0
    %108 = vmatpush1.bf16.msra.mxu0 0
    %109 = vmatprep.subr.bf16.mxu0 0
    %110 = vmatpush1.bf16.msra.mxu0 0
    %111 = vmatprep.subr.bf16.mxu0 0
    %112 = vmatpush1.bf16.msra.mxu0 0
    %113 = vmatprep.subr.bf16.mxu0 0
    %114 = vmatpush1.bf16.msra.mxu0 %v97
    %115 = vmatprep.subr.bf16.mxu0 0
    %116 = vmatpush2.bf16.msra.mxu0 0
    %117 = vmatprep.subr.bf16.mxu0 0
    %118 = vmatpush2.bf16.msra.mxu0 0
    %119 = vmatprep.subr.bf16.mxu0 0
    %120 = vmatpush2.bf16.msra.mxu0 0
    %121 = vmatprep.subr.bf16.mxu0 0
    %122 = vmatpush2.bf16.msra.mxu0 0
    %123 = vmatprep.subr.bf16.mxu0 0
    %124 = vmatpush2.bf16.msra.mxu0 0
    %125 = vmatprep.subr.bf16.mxu0 0
    %126 = vmatpush2.bf16.msra.mxu0 0
    %127 = vmatprep.subr.bf16.mxu0 0
    %128 = vmatpush2.bf16.msra.mxu0 0
    %129 = vmatprep.subr.bf16.mxu0 0
    %130 = vmatpush2.bf16.msra.mxu0 0
    %131 = vmatprep.mubr.bf16.mxu0 0
    %132 = vmatmul.mubr.bf16.gmra.mxu0 %v72
    %v133 = vpop.f32.mrf.mxu0
    %v134 = vadd.f32 0.0, %v133
    %v135 = vpop.f32.mrf.mxu0
    %v136 = vpop.f32.mrf.mxu0
    %v137 = vadd.f32 0.0, %v136
    %v138 = vpop.f32.mrf.mxu0
    %139 = vmatprep.mubr.bf16.mxu0 0
    %140 = vmatmul.mubr.bf16.gmra.mxu0 %v75
    %v141 = vpop.f32.mrf.mxu0
    %v142 = vadd.f32 0.0, %v141
    %v143 = vpop.f32.mrf.mxu0
    %v144 = vpop.f32.mrf.mxu0
    %v145 = vadd.f32 0.0, %v144
    %v146 = vpop.f32.mrf.mxu0
    %147 = vmatprep.mubr.bf16.mxu0 0
    %148 = vmatmul.mubr.bf16.gmra.mxu0 %v78
    %v149 = vpop.f32.mrf.mxu0
    %v150 = vadd.f32 0.0, %v149
    %v151 = vpop.f32.mrf.mxu0
    %v152 = vpop.f32.mrf.mxu0
    %v153 = vadd.f32 0.0, %v152
    %v154 = vpop.f32.mrf.mxu0
    %155 = vmatprep.mubr.bf16.mxu0 0
    %156 = vmatmul.mubr.bf16.gmra.mxu0 %v81
    %v157 = vpop.f32.mrf.mxu0
    %v158 = vadd.f32 0.0, %v157
    %v159 = vpop.f32.mrf.mxu0
    %v160 = vpop.f32.mrf.mxu0
    %v161 = vadd.f32 0.0, %v160
    %v162 = vpop.f32.mrf.mxu0
    %163 = vmatprep.mubr.bf16.mxu0 0
    %164 = vmatmul.mubr.bf16.gmra.mxu0 %v84
    %v165 = vpop.f32.mrf.mxu0
    %v166 = vadd.f32 0.0, %v165
    %v167 = vpop.f32.mrf.mxu0
    %v168 = vpop.f32.mrf.mxu0
    %v169 = vadd.f32 0.0, %v168
    %v170 = vpop.f32.mrf.mxu0
    %171 = vmatprep.mubr.bf16.mxu0 0
    %172 = vmatmul.mubr.bf16.gmra.mxu0 %v87
    %v173 = vpop.f32.mrf.mxu0
    %v174 = vadd.f32 0.0, %v173
    %v175 = vpop.f32.mrf.mxu0
    %v176 = vpop.f32.mrf.mxu0
    %v177 = vadd.f32 0.0, %v176
    %v178 = vpop.f32.mrf.mxu0
    %179 = vmatprep.mubr.bf16.mxu0 0
    %180 = vmatmul.mubr.bf16.gmra.mxu0 %v90
    %v181 = vpop.f32.mrf.mxu0
    %v182 = vadd.f32 0.0, %v181
    %v183 = vpop.f32.mrf.mxu0
    %v184 = vpop.f32.mrf.mxu0
    %v185 = vadd.f32 0.0, %v184
    %v186 = vpop.f32.mrf.mxu0
    %187 = vmatprep.mubr.bf16.mxu0 0
    %188 = vmatmul.mubr.bf16.gmra.mxu0 %v93
    %v189 = vpop.f32.mrf.mxu0
    %v190 = vadd.f32 0.0, %v189
    %v191 = vpop.f32.mrf.mxu0
    %v192 = vpop.f32.mrf.mxu0
    %v193 = vadd.f32 0.0, %v192
    %v194 = vpop.f32.mrf.mxu0
    %195 = vdwg.mxu0
    %v196 = vpack.c.bf16 %v137, %v134
    %v197 = vpack.c.bf16 %v145, %v142
    %v198 = vpack.c.bf16 %v153, %v150
    %v199 = vpack.c.bf16 %v161, %v158
    %v200 = vpack.c.bf16 %v169, %v166
    %v201 = vpack.c.bf16 %v177, %v174
    %v202 = vpack.c.bf16 %v185, %v182
    %v203 = vpack.c.bf16 %v193, %v190
    %v212 = vunpack.c.l.b16 %v196
    %v213 = vunpack.c.h.b16 %v196
    %v214 = vunpack.c.l.b16 %v197
    %v215 = vunpack.c.h.b16 %v197
    %v216 = vunpack.c.l.b16 %v198
    %v217 = vunpack.c.h.b16 %v198
    %v218 = vunpack.c.l.b16 %v199
    %v219 = vunpack.c.h.b16 %v199
    %v220 = vunpack.c.l.b16 %v200
    %v221 = vunpack.c.h.b16 %v200
    %v222 = vunpack.c.l.b16 %v201
    %v223 = vunpack.c.h.b16 %v201
    %v224 = vunpack.c.l.b16 %v202
    %v225 = vunpack.c.h.b16 %v202
    %v226 = vunpack.c.l.b16 %v203
    %v227 = vunpack.c.h.b16 %v203
    %v228 = vpack.c.b16 %v212, %v212
    %v229 = vpack.c.b16 %v213, %v213
    %v230 = vpack.c.b16 %v214, %v214
    %v231 = vpack.c.b16 %v215, %v215
    %v232 = vpack.c.b16 %v216, %v216
    %v233 = vpack.c.b16 %v217, %v217
    %v234 = vpack.c.b16 %v218, %v218
    %v235 = vpack.c.b16 %v219, %v219
    %v236 = vpack.c.b16 %v220, %v220
    %v237 = vpack.c.b16 %v221, %v221
    %v238 = vpack.c.b16 %v222, %v222
    %v239 = vpack.c.b16 %v223, %v223
    %v240 = vpack.c.b16 %v224, %v224
    %v241 = vpack.c.b16 %v225, %v225
    %v242 = vpack.c.b16 %v226, %v226
    %v243 = vpack.c.b16 %v227, %v227
    %260 = vst [vmem:[#allocation2] sm:$0xf] %v228
    %261 = vst [vmem:[#allocation2 + $0x4] sm:$0xf] %v229
    %262 = vst [vmem:[#allocation2 + $0x8] sm:$0xf] %v230
    %263 = vst [vmem:[#allocation2 + $0xc] sm:$0xf] %v231
    %264 = vst [vmem:[#allocation2 + $0x10] sm:$0xf] %v232
    %265 = vst [vmem:[#allocation2 + $0x14] sm:$0xf] %v233
    %266 = vst [vmem:[#allocation2 + $0x18] sm:$0xf] %v234
    %267 = vst [vmem:[#allocation2 + $0x1c] sm:$0xf] %v235
    %268 = vst [vmem:[#allocation2 + $0x20] sm:$0xf] %v236
    %269 = vst [vmem:[#allocation2 + $0x24] sm:$0xf] %v237
    %270 = vst [vmem:[#allocation2 + $0x28] sm:$0xf] %v238
    %271 = vst [vmem:[#allocation2 + $0x2c] sm:$0xf] %v239
    %272 = vst [vmem:[#allocation2 + $0x30] sm:$0xf] %v240
    %273 = vst [vmem:[#allocation2 + $0x34] sm:$0xf] %v241
    %274 = vst [vmem:[#allocation2 + $0x38] sm:$0xf] %v242
    %275 = vst [vmem:[#allocation2 + $0x3c] sm:$0xf] %v243
    // Predicated region
    $region10: #{tpu_custom_call.1} parent=1 // pred_check
      _
    $region11: #{tpu_custom_call.1} parent=1 // pred_check_branch
      %277 = sbr.rel (0) target = $region13
    $region12: #{tpu_custom_call.1} parent=1 // pred_region
      %s279 = ssub.s32 1024, 1024
      %280 = vsyncadd [#allocation3], %s279
      %s281 = sshll.u32 [#allocation2], 4
      %s282 = int_to_ptr.vmem [resolvable:$true] %s281
      %287 = dma.vmem_to_hbm [thread:$0]  %s282, 1024, %s2, [#allocation3], 64, 64, 4
    $region13: #{tpu_custom_call.1} parent=1 // pred_fallthru
      _
    // Predicated region
    $region14: #{tpu_custom_call.1} parent=1 // pred_check
      _
    $region15: #{tpu_custom_call.1} parent=1 // pred_check_branch
      %289 = sbr.rel (0) target = $region17
    $region16: #{tpu_custom_call.1} parent=1 // pred_region
      %290 = dma.done [#allocation3], 1024
    $region17: #{tpu_custom_call.1} parent=1 // pred_fallthru
      _
    %291 = vsyncpa [#allocation3], 1

</llo_original>
